<compile_context>
chip_gen: v7x
topology: tpu7x:2x2x1
jax: 0.10.0
libtpu: 0.0.40
codegen_flags: <defaults>
</compile_context>

<pallas_src>
import jax
import jax.numpy as jnp
from jax import lax
from jax.experimental import pallas as pl
from jax.experimental.pallas import tpu as pltpu

LANE = 128


def _round_up(a, m):
    return ((a + m - 1) // m) * m


def _round_down(a, m):
    return (a // m) * m


def _default_tile_bytes():
    """Per-input-buffer VMEM budget, scaled with the chip's HBM bandwidth.

    Double-buffered (x2 by the BlockSpec pipeline) this stays well under the
    32 MiB vmem limit on every chip (v7x physical VMEM is 64 MiB/TC).
    """
    try:
        kind = jax.devices()[0].device_kind.lower()
    except Exception:
        kind = ""
    if "v7" in kind:
        return 12 * 1024 * 1024      # 3.2 TB/s: amortize per-step overhead
    if "v5 lite" in kind or "v5lite" in kind or "v5e" in kind:
        return 4 * 1024 * 1024       # ~0.82 TB/s: 4 MiB already <7% overhead
    return 8 * 1024 * 1024           # v6e / default


def harmonic_energy(x, k=1.0, *, block_b=None, block_d=None, target_tile_bytes=None):
    """Compute 0.5 * k * sum(x**2, axis=-1) with a Pallas TPU kernel.

    x: (B, D) array. Returns a (B,) array with x's dtype.
    """
    assert x.ndim == 2, "expected x of shape (batch, dim)"
    B, D = x.shape
    itemsize = jnp.dtype(x.dtype).itemsize
    sublane = max(8, 32 // max(itemsize, 1))   # f32: 8 rows/vreg, bf16: 16, int8: 32
    if target_tile_bytes is None:
        target_tile_bytes = _default_tile_bytes()

    # Fixed per-row VMEM cost of the lane-padded (block_b, 1) f32 accumulator
    # plus the double-buffered (block_b, 1) output block (minor dim pads to 128).
    row_overhead = LANE * 4 + 2 * LANE * itemsize

    # ---- feature tile -------------------------------------------------------
    if block_d is None:
        padded_full_d = _round_up(D, LANE)
        rows_full_d = target_tile_bytes // (padded_full_d * itemsize + row_overhead)
        if rows_full_d >= sublane:
            block_d = D              # whole feature dim fits per tile (common case)
        else:
            # Extremely wide rows: tile the reduction axis instead.
            block_d = _round_down(target_tile_bytes // (sublane * itemsize), LANE)
            block_d = max(LANE, block_d)
    if block_d >= D:
        block_d = D                  # full-extent block: legal for any D
    else:
        assert block_d % LANE == 0, "block_d must be a multiple of 128 (or cover D)"
    grid_d = pl.cdiv(D, block_d)
    d_ragged = (D % block_d) != 0    # tail feature block handled by in-kernel mask

    # ---- batch tile ---------------------------------------------------------
    if block_b is None:
        padded_bd = _round_up(block_d, LANE)
        rows = target_tile_bytes // (padded_bd * itemsize + row_overhead)
        rows = max(_round_down(rows, sublane), sublane)
        nblocks = pl.cdiv(B, rows)
        # v7x megacore: give the "parallel" batch axis >=2 blocks when the
        # problem is large enough to be worth splitting across both TensorCores.
        if nblocks < 2 and B >= 2 * sublane and B * D * itemsize >= (2 << 20):
            nblocks = 2
        block_b = _round_up(pl.cdiv(B, nblocks), sublane)
    if block_b >= B:
        block_b = B                  # full-extent block: legal for any B
    else:
        assert block_b % sublane == 0, (
            f"block_b must be a multiple of {sublane} for dtype {x.dtype} (or >= B)")
    grid_b = pl.cdiv(B, block_b)

    def kernel(half_k_ref, x_ref, o_ref, acc_ref):
        j = pl.program_id(1)

        @pl.when(j == 0)
        def _init():
            acc_ref[...] = jnp.zeros_like(acc_ref)

        # Hot path: VPU square + lane-axis reduction, accumulated in f32.
        # (For bf16 inputs on v6e/v7x a native-dtype square would shave one VALU
        # op/element; kept f32 upcast for accuracy and v5e compatibility.)
        xf = x_ref[...].astype(jnp.float32)
        xx = xf * xf
        if d_ragged:
            # cdiv grid: the last feature block reads past D; zero those lanes
            # instead of padding x in HBM (which would cost a full extra
            # read+write of x).
            col = j * block_d + lax.broadcasted_iota(jnp.int32, xx.shape, 1)
            xx = jnp.where(col < D, xx, 0.0)
        acc_ref[...] += jnp.sum(xx, axis=-1, keepdims=True)

        @pl.when(j == pl.num_programs(1) - 1)
        def _finalize():
            o_ref[...] = (half_k_ref[0] * acc_ref[...]).astype(o_ref.dtype)

    # 0.5*k as a runtime scalar-prefetch operand: one compiled kernel for all k.
    half_k = (0.5 * jnp.asarray(k, dtype=jnp.float32)).reshape((1,))

    out = pl.pallas_call(
        kernel,
        out_shape=jax.ShapeDtypeStruct((B, 1), x.dtype),
        grid_spec=pltpu.PrefetchScalarGridSpec(
            num_scalar_prefetch=1,
            grid=(grid_b, grid_d),
            # index_maps receive the scalar-prefetch ref as a trailing arg.
            in_specs=[pl.BlockSpec((block_b, block_d), lambda i, j, hk: (i, j))],
            out_specs=pl.BlockSpec((block_b, 1), lambda i, j, hk: (i, 0)),
            scratch_shapes=[pltpu.VMEM((block_b, 1), jnp.float32)],
        ),
        compiler_params=pltpu.CompilerParams(
            dimension_semantics=("parallel", "arbitrary"),
            vmem_limit_bytes=32 * 1024 * 1024,
        ),
        cost_estimate=pl.CostEstimate(
            flops=2 * B * D,
            transcendentals=0,
            bytes_accessed=B * D * itemsize + B * itemsize,
        ),
    )(half_k, x)

    return out[:, 0]   # squeeze to torch's .sum(dim=-1) shape (B,)


if __name__ == "__main__":
    k = 2.0

    # Default path: whole feature dim per tile, single batch block.
    B, D = 8, 32
    x = jax.random.normal(jax.random.PRNGKey(0), (B, D), dtype=jnp.float32)
    energy = harmonic_energy(x, k)
    jax.block_until_ready(energy)
    ref = 0.5 * k * jnp.sum(x * x, axis=-1)
    assert energy.shape == (B,)
    assert jnp.allclose(energy, ref, atol=1e-5, rtol=1e-5)

    # Tiled path at small scale: 2 batch blocks x 2 feature (reduction) blocks
    # -> accumulator init / accumulate / finalize all exercised.
    x2 = jax.random.normal(jax.random.PRNGKey(1), (16, 256), dtype=jnp.float32)
    e2 = harmonic_energy(x2, k=0.7, block_b=8, block_d=128)
    jax.block_until_ready(e2)
    ref2 = 0.5 * 0.7 * jnp.sum(x2 * x2, axis=-1)
    assert e2.shape == (16,)
    assert jnp.allclose(e2, ref2, atol=1e-5, rtol=1e-5)

    # Ragged path: cdiv grids + in-kernel feature-tail masking, dropped
    # out-of-bounds batch writes (no jnp.pad HBM copies).
    x3 = jax.random.normal(jax.random.PRNGKey(2), (10, 200), dtype=jnp.float32)
    e3 = harmonic_energy(x3, k=1.3, block_b=8, block_d=128)
    jax.block_until_ready(e3)
    ref3 = 0.5 * 1.3 * jnp.sum(x3 * x3, axis=-1)
    assert e3.shape == (10,)
    assert jnp.allclose(e3, ref3, atol=1e-5, rtol=1e-5)

    print("KERNEL_OK")
</pallas_src>

<mosaic_0001>
module attributes {stable_mosaic.version = 11 : i64} {
  func.func @kernel(%arg0: i32, %arg1: i32, %arg2: memref<1xf32, #tpu.memory_space<smem>>, %arg3: memref<8x32xf32, #tpu.memory_space<vmem>>, %arg4: memref<8x1xf32, #tpu.memory_space<vmem>>, %arg5: memref<8x1xf32, #tpu.memory_space<vmem>>) attributes {dimension_semantics = [#tpu.dimension_semantics<parallel>, #tpu.dimension_semantics<arbitrary>], iteration_bounds = array<i64: 1, 1>, scalar_prefetch = 1 : i64, scratch_operands = 1 : i64, tpu.core_type = #tpu.core_type<tc>, window_params = [{transform_indices = @transform_0, window_bounds = array<i64: 8, 32>}, {transform_indices = @transform_1, window_bounds = array<i64: 8, 1>}]} {
    %c0_i32 = arith.constant 0 : i32
    %0 = arith.cmpi eq, %arg1, %c0_i32 : i32
    %1 = arith.extui %0 : i1 to i32
    %c0_i32_0 = arith.constant 0 : i32
    %2 = arith.cmpi ne, %1, %c0_i32_0 : i32
    scf.if %2 {
      %cst_8 = arith.constant 0.000000e+00 : f32
      %13 = vector.broadcast %cst_8 : f32 to vector<8x1xf32>
      %c0_9 = arith.constant 0 : index
      %c0_10 = arith.constant 0 : index
      %14 = vector.load %arg5[%c0_9, %c0_10] : memref<8x1xf32, #tpu.memory_space<vmem>>, vector<8x1xf32>
      tpu.vector_store %arg5[%c0_9, %c0_10], %13 {strides = array<i32>} : memref<8x1xf32, #tpu.memory_space<vmem>>, vector<8x1xf32>,
    } else {
    }
    %c0 = arith.constant 0 : index
    %c0_1 = arith.constant 0 : index
    %3 = vector.load %arg3[%c0, %c0_1] : memref<8x32xf32, #tpu.memory_space<vmem>>, vector<8x32xf32>
    %4 = arith.mulf %3, %3 : vector<8x32xf32>
    %c0_2 = arith.constant 0 : index
    %c0_3 = arith.constant 0 : index
    %5 = vector.load %arg5[%c0_2, %c0_3] : memref<8x1xf32, #tpu.memory_space<vmem>>, vector<8x1xf32>
    %cst = arith.constant dense<0.000000e+00> : vector<8xf32>
    %6 = vector.multi_reduction <add>, %4, %cst [1] : vector<8x32xf32> to vector<8xf32>
    %7 = vector.shape_cast %6 : vector<8xf32> to vector<8x1xf32>
    %8 = arith.addf %5, %7 : vector<8x1xf32>
    %c0_4 = arith.constant 0 : index
    %c0_5 = arith.constant 0 : index
    %9 = vector.load %arg5[%c0_4, %c0_5] : memref<8x1xf32, #tpu.memory_space<vmem>>, vector<8x1xf32>
    tpu.vector_store %arg5[%c0_4, %c0_5], %8 {strides = array<i32>} : memref<8x1xf32, #tpu.memory_space<vmem>>, vector<8x1xf32>,
    %c0_i32_6 = arith.constant 0 : i32
    %10 = arith.cmpi eq, %arg1, %c0_i32_6 : i32
    %11 = arith.extui %10 : i1 to i32
    %c0_i32_7 = arith.constant 0 : i32
    %12 = arith.cmpi ne, %11, %c0_i32_7 : i32
    scf.if %12 {
      %c0_8 = arith.constant 0 : index
      %13 = memref.load %arg2[%c0_8] : memref<1xf32, #tpu.memory_space<smem>>
      %c0_9 = arith.constant 0 : index
      %c0_10 = arith.constant 0 : index
      %14 = vector.load %arg5[%c0_9, %c0_10] : memref<8x1xf32, #tpu.memory_space<vmem>>, vector<8x1xf32>
      %15 = vector.broadcast %13 : f32 to vector<8x1xf32>
      %16 = arith.mulf %15, %14 : vector<8x1xf32>
      %c0_11 = arith.constant 0 : index
      %c0_12 = arith.constant 0 : index
      %17 = vector.load %arg4[%c0_11, %c0_12] : memref<8x1xf32, #tpu.memory_space<vmem>>, vector<8x1xf32>
      tpu.vector_store %arg4[%c0_11, %c0_12], %16 {strides = array<i32>} : memref<8x1xf32, #tpu.memory_space<vmem>>, vector<8x1xf32>,
    } else {
    }
    return
  }
  func.func @transform_0(%arg0: i32, %arg1: i32, %arg2: memref<1xf32, #tpu.memory_space<smem>>) -> (i32, i32) {
    %c0_i32 = arith.constant 0 : i32
    return %arg0, %arg1 : i32, i32
  }
  func.func @transform_1(%arg0: i32, %arg1: i32, %arg2: memref<1xf32, #tpu.memory_space<smem>>) -> (i32, i32) {
    %c0_i32 = arith.constant 0 : i32
    %c0_i32_0 = arith.constant 0 : i32
    return %arg0, %c0_i32 : i32, i32
  }
}

</mosaic_0001>

<llo_original>
// kernel: tpu_custom_call.1
$region0: #{tpu_custom_call.1}
  #allocation0 [shape = 'u32[]', space=smem, size = 0x4, offset = 0x4, fixed_abs, tag = 'smem constant byte address 0x4 - core index']
  #allocation1 [shape = 'u32[144,128]{1,0:T(1,128)}', space=vmem, size = 0x12000, scoped, tag = 'internal scratch']
  #allocation2 [shape = 'f32[8,1]{1,0:T(8,128)}', space=vmem, size = 0x1000, scoped, tag = 'scratch operand']
  #allocation3 [shape = 's32[1]{0}', space=sflag, size = 0x4, scoped, tag = 'scoped memory for tpu_custom_call.1']
  #allocation4 [shape = 'f32[1]{0:T(128)S(6)}', space=smem, size = 0x200, scoped, tag = 'prefetched SMEM operand 0']
  %s0 = inlined_call_operand.<no memory space> [shape: f32[1], index: 0, kind: input, shape index: {}]
  %s1 = inlined_call_operand.hbm [shape: f32[8,32], index: 1, kind: input, shape index: {}]
  %s2 = inlined_call_operand.vmem [shape: f32[8,1], index: 2, kind: output, shape index: {}]
  %s3 = sld [smem:[#allocation0]]
  $region26: #{tpu_custom_call.1} parent=0
    _
  %s5 = ssub.s32 1, %s3
  %s6 = scalar_select 0, %s5, %s3
  %7 = sst [smem:[#allocation4]] %s0
  $region1: #{tpu_custom_call.1} parent=0
    #allocation5 [shape = 'u8[4096]{0}', space=vmem, size = 0x1000, scoped, tag = 'input window, operand 1, single buffered']
    #allocation6 [shape = 's32[1]{0}', space=sflag, size = 0x4, scoped, tag = 'scoped memory for tpu_custom_call.1']
    %8 = vsyncpa [#allocation6], 0
    // Predicated region
    $region2: #{tpu_custom_call.1} parent=1 // pred_check
      _
    $region3: #{tpu_custom_call.1} parent=1 // pred_check_branch
      %10 = sbr.rel (0) target = $region5
    $region4: #{tpu_custom_call.1} parent=1 // pred_region
      %s12 = ssub.s32 128, 128
      %13 = vsyncadd [#allocation6], %s12
      %s15 = sshll.u32 [#allocation5], 4
      %s16 = int_to_ptr.vmem [resolvable:$true] %s15
      %18 = dma.hbm_to_vmem [thread:$0]  %s1, 128, %s16, [#allocation6]
    $region5: #{tpu_custom_call.1} parent=1 // pred_fallthru
      _
    // Predicated region
    $region6: #{tpu_custom_call.1} parent=1 // pred_check
      _
    $region7: #{tpu_custom_call.1} parent=1 // pred_check_branch
      %20 = sbr.rel (0) target = $region9
    $region8: #{tpu_custom_call.1} parent=1 // pred_region
      %21 = dma.done [#allocation6], 128
    $region9: #{tpu_custom_call.1} parent=1 // pred_fallthru
      _
    %p22 = scmp.eq.s32.totalorder 0, 0
    // Predicated region
    $region10: #{tpu_custom_call.1} parent=1 // pred_check
      %p23 = pneg %p22
    $region11: #{tpu_custom_call.1} parent=1 // pred_check_branch
      %25 = sbr.rel (%p23) target = $region13
    $region12: #{tpu_custom_call.1} parent=1 // pred_region
      %vm26 = vcmask 7168
      %27 = vst.msk [vmem:[#allocation2] sm:$0xff] %vm26, 0.0
    $region13: #{tpu_custom_call.1} parent=1 // pred_fallthru
      _
    %v28 = vld [vmem:[#allocation5] sm:$0xff]
    %v29 = vmul.f32 %v28, %v28
    %v30 = vld [vmem:[#allocation2] sm:$0xff]
    %vm31 = vcmask 261120
    %v32 = vsel %vm31, %v29, 0.0
    %33 = vadd.xlane.f32.xlu0 %v32
    %v34 = vpop.xlane.xlu0 %33
    %v35 = vadd.f32 %v30, %v34
    %vm36 = vcmask 7168
    %37 = vst.msk [vmem:[#allocation2] sm:$0xff] %vm36, %v35
    // Predicated region
    $region14: #{tpu_custom_call.1} parent=1 // pred_check
      %p38 = pneg %p22
    $region15: #{tpu_custom_call.1} parent=1 // pred_check_branch
      %40 = sbr.rel (%p38) target = $region17
    $region16: #{tpu_custom_call.1} parent=1 // pred_region
      %s41 = sld [smem:[#allocation4]]
      %v42 = vld [vmem:[#allocation2] sm:$0xff]
      %v43 = vstv %s41
      %v44 = vmul.f32 %v43, %v42
      %45 = vst.msk [vmem:[%s2] sm:$0xff] %vm36, %v44
    $region17: #{tpu_custom_call.1} parent=1 // pred_fallthru
      _
    // Predicated region
    $region18: #{tpu_custom_call.1} parent=1 // pred_check
      _
    $region19: #{tpu_custom_call.1} parent=1 // pred_check_branch
      %47 = sbr.rel (0) target = $region21
    $region20: #{tpu_custom_call.1} parent=1 // pred_region
      _
    $region21: #{tpu_custom_call.1} parent=1 // pred_fallthru
      _
    // Predicated region
    $region22: #{tpu_custom_call.1} parent=1 // pred_check
      _
    $region23: #{tpu_custom_call.1} parent=1 // pred_check_branch
      %49 = sbr.rel (0) target = $region25
    $region24: #{tpu_custom_call.1} parent=1 // pred_region
      _
    $region25: #{tpu_custom_call.1} parent=1 // pred_fallthru
      _
    %50 = vsyncpa [#allocation6], 1

</llo_original>
